<compile_context>
chip_gen: v6e
topology: v6e:2x2x1
jax: 0.10.0
libtpu: 0.0.40
codegen_flags: <defaults>
</compile_context>

<pallas_src>
import jax
import jax.numpy as jnp
import numpy as np
from jax.experimental import pallas as pl
from jax.experimental.pallas import tpu as pltpu


# ---------------------------------------------------------------------------
# Fused kernel: prepare_inferdata + net_frame + net_sound (FiLM masks + maps)
# ---------------------------------------------------------------------------
def _fused_kernel(mag_ref, frm_ref, wf_ref, bf_ref, wct_ref, bct_ref,
                  mago_ref, mask0_ref, mask1_ref, maps_ref):
    # ---- net_frame.forward_multiframe: global avg pool -> linear -> sigmoid ----
    # frm_ref block: (1, C, HW)  (spatial axis lane-dense)
    pooled = jnp.mean(frm_ref[0], axis=-1, keepdims=True)                 # (C, 1)
    # (C,1)*(C,D) -> sublane reduce -> (1,D): VPU mul + XLU reduce, no MXU (K=C=3)
    feat = jax.nn.sigmoid(
        jnp.sum(pooled * wf_ref[...], axis=0, keepdims=True) + bf_ref[...])  # (1, D)

    # ---- FiLM coefficients: single fused (1,D) x (D,5-pad-8) contraction ----
    # wct_ref is the pre-transposed combined weight (8, D); lane reduce -> (8, 1).
    coefs = jnp.sum(feat * wct_ref[...], axis=-1, keepdims=True) + bct_ref[...]  # (8, 1)
    a0 = coefs[0, 0]
    a1 = coefs[1, 0]
    b0 = coefs[2, 0]
    b1 = coefs[3, 0]
    g = coefs[4, 0]

    # ---- prepare_inferdata (fused): +1e-10, log ----
    # TODO(synk): warpgrid + F.grid_sample log-frequency warp skipped (source N/A).
    m = mag_ref[...] + 1e-10                                              # (1, 1, FT)
    mago_ref[...] = m
    lm = jnp.log(m)

    # ---- net_sound: FiLM per-pixel masks + attention map, sigmoid activation ----
    mask0_ref[...] = jax.nn.sigmoid(lm * a0 + b0)
    mask1_ref[...] = jax.nn.sigmoid(lm * a1 + b1)
    maps_ref[...] = jax.nn.sigmoid(lm * g)


def _fused_forward(mag_flat, frames_flat, w_frame, b_frame, w_coef_t, b_coef_t):
    # mag_flat: (B, 1, FT)   frames_flat: (B, C, HW)
    B, _, FT = mag_flat.shape
    _, C, HW = frames_flat.shape
    D = w_frame.shape[1]

    spec_block = pl.BlockSpec((1, 1, FT), lambda b: (b, 0, 0))
    out_sds = jax.ShapeDtypeStruct((B, 1, FT), jnp.float32)

    return pl.pallas_call(
        _fused_kernel,
        grid=(B,),
        in_specs=(
            spec_block,                                       # mag
            pl.BlockSpec((1, C, HW), lambda b: (b, 0, 0)),    # frames
            pl.BlockSpec((C, D), lambda b: (0, 0)),           # w_frame
            pl.BlockSpec((1, D), lambda b: (0, 0)),           # b_frame
            pl.BlockSpec((8, D), lambda b: (0, 0)),           # w_coef_t (padded to 8 rows)
            pl.BlockSpec((8, 1), lambda b: (0, 0)),           # b_coef_t
        ),
        out_specs=(spec_block, spec_block, spec_block, spec_block),
        out_shape=(out_sds, out_sds, out_sds, out_sds),
        compiler_params=pltpu.CompilerParams(
            dimension_semantics=("parallel",)),
    )(mag_flat, frames_flat, w_frame, b_frame, w_coef_t, b_coef_t)


# ---------------------------------------------------------------------------
# NetWrapper.forward  (MixVis path == forward_avmiximg), glue in plain JAX
# ---------------------------------------------------------------------------
def _net_wrapper_forward_impl(mag_mix, phase_mix, frames, params):
    # mag_mix, phase_mix: (B, 1, F, T) (NCHW);  frames: list of (B, 3, H, W)
    B, _, F, T = mag_mix.shape

    # lane-dense layouts (reshape only; no data rewrite)
    mag_flat = mag_mix.reshape(B, 1, F * T)
    mix_frame = jnp.concatenate(frames, axis=-1)                          # (B, C, H, N*W)
    _, C, H, Wt = mix_frame.shape
    frames_flat = mix_frame.reshape(B, C, H * Wt)

    D = params["w_frame"].shape[1]
    # combined, pre-transposed FiLM weight: rows = [alpha0, alpha1, beta0, beta1, gamma, pad x3]
    w_coef_t = jnp.concatenate(
        [params["wa"].T, params["wb"].T, params["wg"].T,
         jnp.zeros((3, D), jnp.float32)], axis=0)                         # (8, D)
    b_coef_t = jnp.concatenate(
        [params["ba"].T, params["bb"].T, jnp.zeros((4, 1), jnp.float32)], axis=0)  # (8, 1)

    mag_out, mask0, mask1, maps = _fused_forward(
        mag_flat, frames_flat, params["w_frame"], params["b_frame"],
        w_coef_t, b_coef_t)

    # pred_masks[i] emitted directly in their final (B,1,F,T) layout — the original
    # permute(0,2,3,1) + per-channel split is an identity on these slices.
    pred_masks = [mask0.reshape(B, 1, F, T), mask1.reshape(B, 1, F, T)]
    return {
        "pred_masks": pred_masks,
        "phase_mix": phase_mix,
        "mag_mix": mag_out.reshape(B, 1, F, T),
        "maps": maps.reshape(B, 1, F, T),
    }


net_wrapper_forward = jax.jit(_net_wrapper_forward_impl)


# ---------------------------------------------------------------------------
# Pure-JAX reference (same synthetic nets) for correctness checking
# ---------------------------------------------------------------------------
def _reference_forward(mag_mix, phase_mix, frames, params):
    B = mag_mix.shape[0]
    magp = mag_mix + 1e-10
    logm = jnp.log(magp)                                                  # (B,1,F,T)
    mix_frame = jnp.concatenate(frames, axis=-1)                          # (B,C,H,Wt)
    pooled = jnp.mean(mix_frame, axis=(2, 3))                             # (B,C)
    feat = jax.nn.sigmoid(pooled @ params["w_frame"] + params["b_frame"])  # (B,D)
    alpha = feat @ params["wa"] + params["ba"]                            # (B,2)
    beta = feat @ params["wb"] + params["bb"]                             # (B,2)
    gamma = feat @ params["wg"]                                           # (B,1)
    masks = [jax.nn.sigmoid(logm * alpha[:, k].reshape(B, 1, 1, 1)
                            + beta[:, k].reshape(B, 1, 1, 1)) for k in range(2)]
    maps = jax.nn.sigmoid(logm * gamma.reshape(B, 1, 1, 1))
    return magp, masks, maps


# ---------------------------------------------------------------------------
# Deterministic synthetic parameter init + driver
# ---------------------------------------------------------------------------
def make_params(C=3, D=32):
    ks = jax.random.split(jax.random.PRNGKey(42), 6)
    return {
        "w_frame": jax.random.normal(ks[0], (C, D), jnp.float32) * 0.1,
        "b_frame": jax.random.normal(ks[1], (1, D), jnp.float32) * 0.1,
        "wa": jax.random.normal(ks[2], (D, 2), jnp.float32) * 0.1,
        "ba": jax.random.normal(ks[3], (1, 2), jnp.float32) * 0.1,
        "wb": jax.random.normal(ks[4], (D, 2), jnp.float32) * 0.1,
        "bb": jax.random.normal(ks[5], (1, 2), jnp.float32) * 0.1,
        "wg": jnp.linspace(-0.1, 0.1, D, dtype=jnp.float32).reshape(D, 1),
    }


if __name__ == "__main__":
    B, C, H, W = 2, 3, 16, 16      # small video frames (2 frames concat -> W_total=32)
    F, T = 32, 16                  # small spectrogram; F*T = 512 (lane-dense)
    N_MIX = 2

    key = jax.random.PRNGKey(0)
    k1, k2, k3, k4 = jax.random.split(key, 4)
    mag_mix = jax.random.uniform(k1, (B, 1, F, T), jnp.float32) + 0.1
    phase_mix = jax.random.uniform(k2, (B, 1, F, T), jnp.float32) * 2.0 - 1.0
    frames = [
        jax.random.normal(k3, (B, C, H, W), jnp.float32),
        jax.random.normal(k4, (B, C, H, W), jnp.float32),
    ]
    params = make_params(C=C, D=32)

    out = net_wrapper_forward(mag_mix, phase_mix, frames, params)
    jax.block_until_ready(out)

    # structural checks
    assert len(out["pred_masks"]) == N_MIX
    assert out["pred_masks"][0].shape == (B, 1, F, T)
    assert out["mag_mix"].shape == (B, 1, F, T)
    assert out["maps"].shape == (B, 1, F, T)

    # numeric check against the pure-JAX reference
    ref_mag, ref_masks, ref_maps = _reference_forward(mag_mix, phase_mix, frames, params)
    np.testing.assert_allclose(out["mag_mix"], ref_mag, rtol=1e-3, atol=1e-3)
    np.testing.assert_allclose(out["maps"], ref_maps, rtol=1e-3, atol=1e-3)
    for k in range(N_MIX):
        np.testing.assert_allclose(out["pred_masks"][k], ref_masks[k], rtol=1e-3, atol=1e-3)

    print("KERNEL_OK")
</pallas_src>

<mosaic_0001>
module attributes {stable_mosaic.version = 11 : i64} {
  func.func @_fused_kernel(%arg0: i32, %arg1: memref<1x1x512xf32, #tpu.memory_space<vmem>>, %arg2: memref<1x3x512xf32, #tpu.memory_space<vmem>>, %arg3: memref<3x32xf32, #tpu.memory_space<vmem>>, %arg4: memref<1x32xf32, #tpu.memory_space<vmem>>, %arg5: memref<8x32xf32, #tpu.memory_space<vmem>>, %arg6: memref<8x1xf32, #tpu.memory_space<vmem>>, %arg7: memref<1x1x512xf32, #tpu.memory_space<vmem>>, %arg8: memref<1x1x512xf32, #tpu.memory_space<vmem>>, %arg9: memref<1x1x512xf32, #tpu.memory_space<vmem>>, %arg10: memref<1x1x512xf32, #tpu.memory_space<vmem>>) attributes {dimension_semantics = [#tpu.dimension_semantics<parallel>], iteration_bounds = array<i64: 2>, scalar_prefetch = 0 : i64, scratch_operands = 0 : i64, tpu.core_type = #tpu.core_type<tc>, window_params = [{transform_indices = @transform_0, window_bounds = array<i64: 1, 1, 512>}, {transform_indices = @transform_1, window_bounds = array<i64: 1, 3, 512>}, {pipeline_mode = #tpu.pipeline_mode<synchronous>, transform_indices = @transform_2, window_bounds = array<i64: 3, 32>}, {pipeline_mode = #tpu.pipeline_mode<synchronous>, transform_indices = @transform_3, window_bounds = array<i64: 1, 32>}, {pipeline_mode = #tpu.pipeline_mode<synchronous>, transform_indices = @transform_4, window_bounds = array<i64: 8, 32>}, {pipeline_mode = #tpu.pipeline_mode<synchronous>, transform_indices = @transform_5, window_bounds = array<i64: 8, 1>}, {transform_indices = @transform_6, window_bounds = array<i64: 1, 1, 512>}, {transform_indices = @transform_7, window_bounds = array<i64: 1, 1, 512>}, {transform_indices = @transform_8, window_bounds = array<i64: 1, 1, 512>}, {transform_indices = @transform_9, window_bounds = array<i64: 1, 1, 512>}]} {
    %c0 = arith.constant 0 : index
    %c0_0 = arith.constant 0 : index
    %c0_1 = arith.constant 0 : index
    %0 = vector.load %arg2[%c0, %c0_0, %c0_1] : memref<1x3x512xf32, #tpu.memory_space<vmem>>, vector<1x3x512xf32>
    %1 = vector.shape_cast %0 : vector<1x3x512xf32> to vector<3x512xf32>
    %cst = arith.constant dense<0.000000e+00> : vector<3xf32>
    %2 = vector.multi_reduction <add>, %1, %cst [1] : vector<3x512xf32> to vector<3xf32>
    %3 = vector.shape_cast %2 : vector<3xf32> to vector<3x1xf32>
    %cst_2 = arith.constant 5.120000e+02 : f32
    %4 = vector.broadcast %cst_2 : f32 to vector<3x1xf32>
    %5 = arith.divf %3, %4 : vector<3x1xf32>
    %c0_3 = arith.constant 0 : index
    %c0_4 = arith.constant 0 : index
    %6 = vector.load %arg3[%c0_3, %c0_4] : memref<3x32xf32, #tpu.memory_space<vmem>>, vector<3x32xf32>
    %7 = vector.broadcast %5 : vector<3x1xf32> to vector<3x32xf32>
    %8 = arith.mulf %7, %6 : vector<3x32xf32>
    %cst_5 = arith.constant dense<0.000000e+00> : vector<32xf32>
    %9 = vector.multi_reduction <add>, %8, %cst_5 [0] : vector<3x32xf32> to vector<32xf32>
    %10 = vector.shape_cast %9 : vector<32xf32> to vector<1x32xf32>
    %c0_6 = arith.constant 0 : index
    %c0_7 = arith.constant 0 : index
    %11 = vector.load %arg4[%c0_6, %c0_7] : memref<1x32xf32, #tpu.memory_space<vmem>>, vector<1x32xf32>
    %12 = arith.addf %10, %11 : vector<1x32xf32>
    %13 = arith.negf %12 : vector<1x32xf32>
    %14 = math.exp %13 : vector<1x32xf32>
    %cst_8 = arith.constant 1.000000e+00 : f32
    %15 = vector.broadcast %cst_8 : f32 to vector<1x32xf32>
    %16 = arith.addf %15, %14 : vector<1x32xf32>
    %17 = arith.divf %15, %16 : vector<1x32xf32>
    %c0_9 = arith.constant 0 : index
    %c0_10 = arith.constant 0 : index
    %18 = vector.load %arg5[%c0_9, %c0_10] : memref<8x32xf32, #tpu.memory_space<vmem>>, vector<8x32xf32>
    %19 = vector.broadcast %17 : vector<1x32xf32> to vector<8x32xf32>
    %20 = arith.mulf %19, %18 : vector<8x32xf32>
    %cst_11 = arith.constant dense<0.000000e+00> : vector<8xf32>
    %21 = vector.multi_reduction <add>, %20, %cst_11 [1] : vector<8x32xf32> to vector<8xf32>
    %22 = vector.shape_cast %21 : vector<8xf32> to vector<8x1xf32>
    %c0_12 = arith.constant 0 : index
    %c0_13 = arith.constant 0 : index
    %23 = vector.load %arg6[%c0_12, %c0_13] : memref<8x1xf32, #tpu.memory_space<vmem>>, vector<8x1xf32>
    %24 = arith.addf %22, %23 : vector<8x1xf32>
    %25 = vector.extract_strided_slice %24 {offsets = [0, 0], sizes = [1, 1], strides = [1, 1]} : vector<8x1xf32> to vector<1x1xf32>
    %26 = vector.extract %25[0, 0] : f32 from vector<1x1xf32>
    %27 = vector.extract_strided_slice %24 {offsets = [1, 0], sizes = [1, 1], strides = [1, 1]} : vector<8x1xf32> to vector<1x1xf32>
    %28 = vector.extract %27[0, 0] : f32 from vector<1x1xf32>
    %29 = vector.extract_strided_slice %24 {offsets = [2, 0], sizes = [1, 1], strides = [1, 1]} : vector<8x1xf32> to vector<1x1xf32>
    %30 = vector.extract %29[0, 0] : f32 from vector<1x1xf32>
    %31 = vector.extract_strided_slice %24 {offsets = [3, 0], sizes = [1, 1], strides = [1, 1]} : vector<8x1xf32> to vector<1x1xf32>
    %32 = vector.extract %31[0, 0] : f32 from vector<1x1xf32>
    %33 = vector.extract_strided_slice %24 {offsets = [4, 0], sizes = [1, 1], strides = [1, 1]} : vector<8x1xf32> to vector<1x1xf32>
    %34 = vector.extract %33[0, 0] : f32 from vector<1x1xf32>
    %c0_14 = arith.constant 0 : index
    %c0_15 = arith.constant 0 : index
    %c0_16 = arith.constant 0 : index
    %35 = vector.load %arg1[%c0_14, %c0_15, %c0_16] : memref<1x1x512xf32, #tpu.memory_space<vmem>>, vector<1x1x512xf32>
    %cst_17 = arith.constant 1.000000e-10 : f32
    %36 = vector.broadcast %cst_17 : f32 to vector<1x1x512xf32>
    %37 = arith.addf %35, %36 : vector<1x1x512xf32>
    %c0_18 = arith.constant 0 : index
    %c0_19 = arith.constant 0 : index
    %c0_20 = arith.constant 0 : index
    %38 = vector.load %arg7[%c0_18, %c0_19, %c0_20] : memref<1x1x512xf32, #tpu.memory_space<vmem>>, vector<1x1x512xf32>
    tpu.vector_store %arg7[%c0_18, %c0_19, %c0_20], %37 {strides = array<i32>} : memref<1x1x512xf32, #tpu.memory_space<vmem>>, vector<1x1x512xf32>,
    %39 = math.log %37 : vector<1x1x512xf32>
    %40 = vector.broadcast %26 : f32 to vector<1x1x512xf32>
    %41 = arith.mulf %39, %40 : vector<1x1x512xf32>
    %42 = vector.broadcast %30 : f32 to vector<1x1x512xf32>
    %43 = arith.addf %41, %42 : vector<1x1x512xf32>
    %44 = arith.negf %43 : vector<1x1x512xf32>
    %45 = math.exp %44 : vector<1x1x512xf32>
    %cst_21 = arith.constant 1.000000e+00 : f32
    %46 = vector.broadcast %cst_21 : f32 to vector<1x1x512xf32>
    %47 = arith.addf %46, %45 : vector<1x1x512xf32>
    %48 = arith.divf %46, %47 : vector<1x1x512xf32>
    %c0_22 = arith.constant 0 : index
    %c0_23 = arith.constant 0 : index
    %c0_24 = arith.constant 0 : index
    %49 = vector.load %arg8[%c0_22, %c0_23, %c0_24] : memref<1x1x512xf32, #tpu.memory_space<vmem>>, vector<1x1x512xf32>
    tpu.vector_store %arg8[%c0_22, %c0_23, %c0_24], %48 {strides = array<i32>} : memref<1x1x512xf32, #tpu.memory_space<vmem>>, vector<1x1x512xf32>,
    %50 = vector.broadcast %28 : f32 to vector<1x1x512xf32>
    %51 = arith.mulf %39, %50 : vector<1x1x512xf32>
    %52 = vector.broadcast %32 : f32 to vector<1x1x512xf32>
    %53 = arith.addf %51, %52 : vector<1x1x512xf32>
    %54 = arith.negf %53 : vector<1x1x512xf32>
    %55 = math.exp %54 : vector<1x1x512xf32>
    %cst_25 = arith.constant 1.000000e+00 : f32
    %56 = vector.broadcast %cst_25 : f32 to vector<1x1x512xf32>
    %57 = arith.addf %56, %55 : vector<1x1x512xf32>
    %58 = arith.divf %56, %57 : vector<1x1x512xf32>
    %c0_26 = arith.constant 0 : index
    %c0_27 = arith.constant 0 : index
    %c0_28 = arith.constant 0 : index
    %59 = vector.load %arg9[%c0_26, %c0_27, %c0_28] : memref<1x1x512xf32, #tpu.memory_space<vmem>>, vector<1x1x512xf32>
    tpu.vector_store %arg9[%c0_26, %c0_27, %c0_28], %58 {strides = array<i32>} : memref<1x1x512xf32, #tpu.memory_space<vmem>>, vector<1x1x512xf32>,
    %60 = vector.broadcast %34 : f32 to vector<1x1x512xf32>
    %61 = arith.mulf %39, %60 : vector<1x1x512xf32>
    %62 = arith.negf %61 : vector<1x1x512xf32>
    %63 = math.exp %62 : vector<1x1x512xf32>
    %cst_29 = arith.constant 1.000000e+00 : f32
    %64 = vector.broadcast %cst_29 : f32 to vector<1x1x512xf32>
    %65 = arith.addf %64, %63 : vector<1x1x512xf32>
    %66 = arith.divf %64, %65 : vector<1x1x512xf32>
    %c0_30 = arith.constant 0 : index
    %c0_31 = arith.constant 0 : index
    %c0_32 = arith.constant 0 : index
    %67 = vector.load %arg10[%c0_30, %c0_31, %c0_32] : memref<1x1x512xf32, #tpu.memory_space<vmem>>, vector<1x1x512xf32>
    tpu.vector_store %arg10[%c0_30, %c0_31, %c0_32], %66 {strides = array<i32>} : memref<1x1x512xf32, #tpu.memory_space<vmem>>, vector<1x1x512xf32>,
    return
  }
  func.func @transform_0(%arg0: i32) -> (i32, i32, i32) {
    %c0_i32 = arith.constant 0 : i32
    %c0_i32_0 = arith.constant 0 : i32
    %c0_i32_1 = arith.constant 0 : i32
    return %arg0, %c0_i32, %c0_i32_0 : i32, i32, i32
  }
  func.func @transform_1(%arg0: i32) -> (i32, i32, i32) {
    %c0_i32 = arith.constant 0 : i32
    %c0_i32_0 = arith.constant 0 : i32
    %c0_i32_1 = arith.constant 0 : i32
    return %arg0, %c0_i32, %c0_i32_0 : i32, i32, i32
  }
  func.func @transform_2(%arg0: i32) -> (i32, i32) {
    %c0_i32 = arith.constant 0 : i32
    %c0_i32_0 = arith.constant 0 : i32
    %c0_i32_1 = arith.constant 0 : i32
    return %c0_i32, %c0_i32_0 : i32, i32
  }
  func.func @transform_3(%arg0: i32) -> (i32, i32) {
    %c0_i32 = arith.constant 0 : i32
    %c0_i32_0 = arith.constant 0 : i32
    %c0_i32_1 = arith.constant 0 : i32
    return %c0_i32, %c0_i32_0 : i32, i32
  }
  func.func @transform_4(%arg0: i32) -> (i32, i32) {
    %c0_i32 = arith.constant 0 : i32
    %c0_i32_0 = arith.constant 0 : i32
    %c0_i32_1 = arith.constant 0 : i32
    return %c0_i32, %c0_i32_0 : i32, i32
  }
  func.func @transform_5(%arg0: i32) -> (i32, i32) {
    %c0_i32 = arith.constant 0 : i32
    %c0_i32_0 = arith.constant 0 : i32
    %c0_i32_1 = arith.constant 0 : i32
    return %c0_i32, %c0_i32_0 : i32, i32
  }
  func.func @transform_6(%arg0: i32) -> (i32, i32, i32) {
    %c0_i32 = arith.constant 0 : i32
    %c0_i32_0 = arith.constant 0 : i32
    %c0_i32_1 = arith.constant 0 : i32
    return %arg0, %c0_i32, %c0_i32_0 : i32, i32, i32
  }
  func.func @transform_7(%arg0: i32) -> (i32, i32, i32) {
    %c0_i32 = arith.constant 0 : i32
    %c0_i32_0 = arith.constant 0 : i32
    %c0_i32_1 = arith.constant 0 : i32
    return %arg0, %c0_i32, %c0_i32_0 : i32, i32, i32
  }
  func.func @transform_8(%arg0: i32) -> (i32, i32, i32) {
    %c0_i32 = arith.constant 0 : i32
    %c0_i32_0 = arith.constant 0 : i32
    %c0_i32_1 = arith.constant 0 : i32
    return %arg0, %c0_i32, %c0_i32_0 : i32, i32, i32
  }
  func.func @transform_9(%arg0: i32) -> (i32, i32, i32) {
    %c0_i32 = arith.constant 0 : i32
    %c0_i32_0 = arith.constant 0 : i32
    %c0_i32_1 = arith.constant 0 : i32
    return %arg0, %c0_i32, %c0_i32_0 : i32, i32, i32
  }
}

</mosaic_0001>

<llo_original>
// kernel: _net_wrapper_forward_impl.1
$region0: #{_net_wrapper_forward_impl.1}
  #allocation0 [shape = 'u32[]', space=smem, size = 0x4, offset = 0x4, fixed_abs, tag = 'smem constant byte address 0x4 - core index']
  #allocation1 [shape = 'u32[144,128]{1,0:T(1,128)}', space=vmem, size = 0x12000, scoped, tag = 'internal scratch']
  %s0 = inlined_call_operand.vmem [shape: f32[2,1,512], index: 0, kind: input, shape index: {}]
  %s1 = inlined_call_operand.vmem [shape: f32[2,3,512], index: 1, kind: input, shape index: {}]
  %s2 = inlined_call_operand.vmem [shape: f32[3,32], index: 2, kind: input, shape index: {}]
  %s3 = inlined_call_operand.vmem [shape: f32[1,32], index: 3, kind: input, shape index: {}]
  %s4 = inlined_call_operand.vmem [shape: f32[8,32], index: 4, kind: input, shape index: {}]
  %s5 = inlined_call_operand.vmem [shape: f32[8,1], index: 5, kind: input, shape index: {}]
  %s6 = inlined_call_operand.vmem [shape: f32[2,1,512], index: 6, kind: output, shape index: {0}]
  %s7 = inlined_call_operand.vmem [shape: f32[2,1,512], index: 7, kind: output, shape index: {1}]
  %s8 = inlined_call_operand.vmem [shape: f32[2,1,512], index: 8, kind: output, shape index: {2}]
  %s9 = inlined_call_operand.vmem [shape: f32[2,1,512], index: 9, kind: output, shape index: {3}]
  %10 = xla_tuple %s6, %s7, %s8, %s9
  %s11 = sld [smem:[#allocation0]]
  $region81: #{_net_wrapper_forward_impl.1} parent=0
    _
  %s13 = ssub.s32 1, %s11
  %s14 = scalar_select 0, %s13, %s11
  loop: start=0, step=1, limit=4
  $region2: #{_net_wrapper_forward_impl.1} parent=0 // loop_pre_header
    _
  $region3: #{_net_wrapper_forward_impl.1} parent=0 // loop_header
    %s16 = sphi 0, %s20
    %p17 = scmp.ge.s32.totalorder %s16, 4
    %s26 = sphi 0, %s28
    %s29 = sphi 0, %s26
    %s30 = sphi 0, %s29
    %s46 = sphi 0, %s30
    %s52 = sphi 0, %s54
    %s55 = sphi 0, %s52
    %s56 = sphi 0, %s55
    %s72 = sphi 0, %s56
    %s76 = sphi 0, %s76
    %s78 = sphi 0, %s76
    %s79 = sphi 0, %s78
    %s93 = sphi 0, %s79
    %s97 = sphi 0, %s97
    %s99 = sphi 0, %s97
    %s100 = sphi 0, %s99
    %s114 = sphi 0, %s100
    %s118 = sphi 0, %s118
    %s120 = sphi 0, %s118
    %s121 = sphi 0, %s120
    %s135 = sphi 0, %s121
    %s139 = sphi 0, %s139
    %s141 = sphi 0, %s139
    %s142 = sphi 0, %s141
    %s156 = sphi 0, %s142
    %s162 = sphi 0, %s164
    %s165 = sphi 0, %s162
    %s166 = sphi 0, %s165
    %s182 = sphi 0, %s166
    %s188 = sphi 0, %s190
    %s191 = sphi 0, %s188
    %s192 = sphi 0, %s191
    %s208 = sphi 0, %s192
    %s214 = sphi 0, %s216
    %s217 = sphi 0, %s214
    %s218 = sphi 0, %s217
    %s234 = sphi 0, %s218
    %s240 = sphi 0, %s242
    %s243 = sphi 0, %s240
    %s244 = sphi 0, %s243
    %s260 = sphi 0, %s244
  $region4: #{_net_wrapper_forward_impl.1} parent=0 // loop_header_branch
    %19 = sbr.rel (%p17) target = $region8
  $region5: #{_net_wrapper_forward_impl.1} parent=0 // loop_body
    %s21 = ssub.s32 %s16, 1
    %s22 = ssub.s32 %s16, 2
    %s23 = sadd.s32 %s16, 1
    %s24 = ssub.s32 %s16, %s23
    %p25 = scmp.eq.s32.totalorder %s24, 0
    %s27 = sadd.s32 %s26, 1
    %s28 = scalar_select %p25, %s26, %s27
    %p31 = pneg %p25
    %p32 = scmp.eq.s32.totalorder %s16, 1
    %p33 = por %p31, %p32
    %p34 = scmp.ne.s32.totalorder %s26, %s29
    %p35 = scmp.eq.s32.totalorder %s16, 0
    %p36 = por %p34, %p35
    %p37 = scmp.ne.s32.totalorder %s26, %s29
    %p38 = scmp.eq.s32.totalorder %s21, 1
    %p39 = por %p37, %p38
    %p40 = scmp.ne.s32.totalorder %s29, %s30
    %p41 = scmp.eq.s32.totalorder %s21, 0
    %p42 = por %p40, %p41
    %p43 = scmp.ne.s32.totalorder %s29, %s30
    %p44 = scmp.eq.s32.totalorder %s22, 1
    %p45 = por %p43, %p44
    %p47 = scmp.ne.s32.totalorder %s30, %s46
    %p48 = scmp.eq.s32.totalorder %s22, 0
    %p49 = por %p47, %p48
    %s50 = ssub.s32 %s16, %s23
    %p51 = scmp.eq.s32.totalorder %s50, 0
    %s53 = sadd.s32 %s52, 1
    %s54 = scalar_select %p51, %s52, %s53
    %p57 = pneg %p51
    %p58 = scmp.eq.s32.totalorder %s16, 1
    %p59 = por %p57, %p58
    %p60 = scmp.ne.s32.totalorder %s52, %s55
    %p61 = scmp.eq.s32.totalorder %s16, 0
    %p62 = por %p60, %p61
    %p63 = scmp.ne.s32.totalorder %s52, %s55
    %p64 = scmp.eq.s32.totalorder %s21, 1
    %p65 = por %p63, %p64
    %p66 = scmp.ne.s32.totalorder %s55, %s56
    %p67 = scmp.eq.s32.totalorder %s21, 0
    %p68 = por %p66, %p67
    %p69 = scmp.ne.s32.totalorder %s55, %s56
    %p70 = scmp.eq.s32.totalorder %s22, 1
    %p71 = por %p69, %p70
    %p73 = scmp.ne.s32.totalorder %s56, %s72
    %p74 = scmp.eq.s32.totalorder %s22, 0
    %p75 = por %p73, %p74
    %s77 = sadd.s32 %s76, 1
    %p80 = scmp.eq.s32.totalorder %s16, 1
    %p81 = scmp.ne.s32.totalorder %s76, %s78
    %p82 = scmp.eq.s32.totalorder %s16, 0
    %p83 = por %p81, %p82
    %p84 = scmp.ne.s32.totalorder %s76, %s78
    %p85 = scmp.eq.s32.totalorder %s21, 1
    %p86 = por %p84, %p85
    %p87 = scmp.ne.s32.totalorder %s78, %s79
    %p88 = scmp.eq.s32.totalorder %s21, 0
    %p89 = por %p87, %p88
    %p90 = scmp.ne.s32.totalorder %s78, %s79
    %p91 = scmp.eq.s32.totalorder %s22, 1
    %p92 = por %p90, %p91
    %p94 = scmp.ne.s32.totalorder %s79, %s93
    %p95 = scmp.eq.s32.totalorder %s22, 0
    %p96 = por %p94, %p95
    %s98 = sadd.s32 %s97, 1
    %p101 = scmp.eq.s32.totalorder %s16, 1
    %p102 = scmp.ne.s32.totalorder %s97, %s99
    %p103 = scmp.eq.s32.totalorder %s16, 0
    %p104 = por %p102, %p103
    %p105 = scmp.ne.s32.totalorder %s97, %s99
    %p106 = scmp.eq.s32.totalorder %s21, 1
    %p107 = por %p105, %p106
    %p108 = scmp.ne.s32.totalorder %s99, %s100
    %p109 = scmp.eq.s32.totalorder %s21, 0
    %p110 = por %p108, %p109
    %p111 = scmp.ne.s32.totalorder %s99, %s100
    %p112 = scmp.eq.s32.totalorder %s22, 1
    %p113 = por %p111, %p112
    %p115 = scmp.ne.s32.totalorder %s100, %s114
    %p116 = scmp.eq.s32.totalorder %s22, 0
    %p117 = por %p115, %p116
    %s119 = sadd.s32 %s118, 1
    %p122 = scmp.eq.s32.totalorder %s16, 1
    %p123 = scmp.ne.s32.totalorder %s118, %s120
    %p124 = scmp.eq.s32.totalorder %s16, 0
    %p125 = por %p123, %p124
    %p126 = scmp.ne.s32.totalorder %s118, %s120
    %p127 = scmp.eq.s32.totalorder %s21, 1
    %p128 = por %p126, %p127
    %p129 = scmp.ne.s32.totalorder %s120, %s121
    %p130 = scmp.eq.s32.totalorder %s21, 0
    %p131 = por %p129, %p130
    %p132 = scmp.ne.s32.totalorder %s120, %s121
    %p133 = scmp.eq.s32.totalorder %s22, 1
    %p134 = por %p132, %p133
    %p136 = scmp.ne.s32.totalorder %s121, %s135
    %p137 = scmp.eq.s32.totalorder %s22, 0
    %p138 = por %p136, %p137
    %s140 = sadd.s32 %s139, 1
    %p143 = scmp.eq.s32.totalorder %s16, 1
    %p144 = scmp.ne.s32.totalorder %s139, %s141
    %p145 = scmp.eq.s32.totalorder %s16, 0
    %p146 = por %p144, %p145
    %p147 = scmp.ne.s32.totalorder %s139, %s141
    %p148 = scmp.eq.s32.totalorder %s21, 1
    %p149 = por %p147, %p148
    %p150 = scmp.ne.s32.totalorder %s141, %s142
    %p151 = scmp.eq.s32.totalorder %s21, 0
    %p152 = por %p150, %p151
    %p153 = scmp.ne.s32.totalorder %s141, %s142
    %p154 = scmp.eq.s32.totalorder %s22, 1
    %p155 = por %p153, %p154
    %p157 = scmp.ne.s32.totalorder %s142, %s156
    %p158 = scmp.eq.s32.totalorder %s22, 0
    %p159 = por %p157, %p158
    %s160 = ssub.s32 %s16, %s23
    %p161 = scmp.eq.s32.totalorder %s160, 0
    %s163 = sadd.s32 %s162, 1
    %s164 = scalar_select %p161, %s162, %s163
    %p167 = pneg %p161
    %p168 = scmp.eq.s32.totalorder %s16, 1
    %p169 = por %p167, %p168
    %p170 = scmp.ne.s32.totalorder %s162, %s165
    %p171 = scmp.eq.s32.totalorder %s16, 0
    %p172 = por %p170, %p171
    %p173 = scmp.ne.s32.totalorder %s162, %s165
    %p174 = scmp.eq.s32.totalorder %s21, 1
    %p175 = por %p173, %p174
    %p176 = scmp.ne.s32.totalorder %s165, %s166
    %p177 = scmp.eq.s32.totalorder %s21, 0
    %p178 = por %p176, %p177
    %p179 = scmp.ne.s32.totalorder %s165, %s166
    %p180 = scmp.eq.s32.totalorder %s22, 1
    %p181 = por %p179, %p180
    %p183 = scmp.ne.s32.totalorder %s166, %s182
    %p184 = scmp.eq.s32.totalorder %s22, 0
    %p185 = por %p183, %p184
    %s186 = ssub.s32 %s16, %s23
    %p187 = scmp.eq.s32.totalorder %s186, 0
    %s189 = sadd.s32 %s188, 1
    %s190 = scalar_select %p187, %s188, %s189
    %p193 = pneg %p187
    %p194 = scmp.eq.s32.totalorder %s16, 1
    %p195 = por %p193, %p194
    %p196 = scmp.ne.s32.totalorder %s188, %s191
    %p197 = scmp.eq.s32.totalorder %s16, 0
    %p198 = por %p196, %p197
    %p199 = scmp.ne.s32.totalorder %s188, %s191
    %p200 = scmp.eq.s32.totalorder %s21, 1
    %p201 = por %p199, %p200
    %p202 = scmp.ne.s32.totalorder %s191, %s192
    %p203 = scmp.eq.s32.totalorder %s21, 0
    %p204 = por %p202, %p203
    %p205 = scmp.ne.s32.totalorder %s191, %s192
    %p206 = scmp.eq.s32.totalorder %s22, 1
    %p207 = por %p205, %p206
    %p209 = scmp.ne.s32.totalorder %s192, %s208
    %p210 = scmp.eq.s32.totalorder %s22, 0
    %p211 = por %p209, %p210
    %s212 = ssub.s32 %s16, %s23
    %p213 = scmp.eq.s32.totalorder %s212, 0
    %s215 = sadd.s32 %s214, 1
    %s216 = scalar_select %p213, %s214, %s215
    %p219 = pneg %p213
    %p220 = scmp.eq.s32.totalorder %s16, 1
    %p221 = por %p219, %p220
    %p222 = scmp.ne.s32.totalorder %s214, %s217
    %p223 = scmp.eq.s32.totalorder %s16, 0
    %p224 = por %p222, %p223
    %p225 = scmp.ne.s32.totalorder %s214, %s217
    %p226 = scmp.eq.s32.totalorder %s21, 1
    %p227 = por %p225, %p226
    %p228 = scmp.ne.s32.totalorder %s217, %s218
    %p229 = scmp.eq.s32.totalorder %s21, 0
    %p230 = por %p228, %p229
    %p231 = scmp.ne.s32.totalorder %s217, %s218
    %p232 = scmp.eq.s32.totalorder %s22, 1
    %p233 = por %p231, %p232
    %p235 = scmp.ne.s32.totalorder %s218, %s234
    %p236 = scmp.eq.s32.totalorder %s22, 0
    %p237 = por %p235, %p236
    %s238 = ssub.s32 %s16, %s23
    %p239 = scmp.eq.s32.totalorder %s238, 0
    %s241 = sadd.s32 %s240, 1
    %s242 = scalar_select %p239, %s240, %s241
    %p245 = pneg %p239
    %p246 = scmp.eq.s32.totalorder %s16, 1
    %p247 = por %p245, %p246
    %p248 = scmp.ne.s32.totalorder %s240, %s243
    %p249 = scmp.eq.s32.totalorder %s16, 0
    %p250 = por %p248, %p249
    %p251 = scmp.ne.s32.totalorder %s240, %s243
    %p252 = scmp.eq.s32.totalorder %s21, 1
    %p253 = por %p251, %p252
    %p254 = scmp.ne.s32.totalorder %s243, %s244
    %p255 = scmp.eq.s32.totalorder %s21, 0
    %p256 = por %p254, %p255
    %p257 = scmp.ne.s32.totalorder %s243, %s244
    %p258 = scmp.eq.s32.totalorder %s22, 1
    %p259 = por %p257, %p258
    %p261 = scmp.ne.s32.totalorder %s244, %s260
    %p262 = scmp.eq.s32.totalorder %s22, 0
    %p263 = por %p261, %p262
    %p264 = scmp.le.s32.totalorder 1, %s16
    %p265 = scmp.lt.s32.totalorder %s16, 3
    %p266 = pnand %p264, %p265
    %p267 = pneg %p266
    // Predicated region
    $region9: #{_net_wrapper_forward_impl.1} parent=5 // pred_check
      _
    $region10: #{_net_wrapper_forward_impl.1} parent=5 // pred_check_branch
      %269 = sbr.rel (%p266) target = $region12
    $region11: #{_net_wrapper_forward_impl.1} parent=5 // pred_region
      %s270 = ssub.s32 %s16, 1
      // Predicated region
      $region13: #{_net_wrapper_forward_impl.1} parent=11 // pred_check
        %p271 = pneg %p89
      $region14: #{_net_wrapper_forward_impl.1} parent=11 // pred_check_branch
        %273 = sbr.rel (%p271) target = $region16
      $region15: #{_net_wrapper_forward_impl.1} parent=11 // pred_region
        _
      $region16: #{_net_wrapper_forward_impl.1} parent=11 // pred_fallthru
        _
      // Predicated region
      $region17: #{_net_wrapper_forward_impl.1} parent=11 // pred_check
        %p274 = pneg %p110
      $region18: #{_net_wrapper_forward_impl.1} parent=11 // pred_check_branch
        %276 = sbr.rel (%p274) target = $region20
      $region19: #{_net_wrapper_forward_impl.1} parent=11 // pred_region
        _
      $region20: #{_net_wrapper_forward_impl.1} parent=11 // pred_fallthru
        _
      // Predicated region
      $region21: #{_net_wrapper_forward_impl.1} parent=11 // pred_check
        %p277 = pneg %p131
      $region22: #{_net_wrapper_forward_impl.1} parent=11 // pred_check_branch
        %279 = sbr.rel (%p277) target = $region24
      $region23: #{_net_wrapper_forward_impl.1} parent=11 // pred_region
        _
      $region24: #{_net_wrapper_forward_impl.1} parent=11 // pred_fallthru
        _
      // Predicated region
      $region25: #{_net_wrapper_forward_impl.1} parent=11 // pred_check
        %p280 = pneg %p152
      $region26: #{_net_wrapper_forward_impl.1} parent=11 // pred_check_branch
        %282 = sbr.rel (%p280) target = $region28
      $region27: #{_net_wrapper_forward_impl.1} parent=11 // pred_region
        _
      $region28: #{_net_wrapper_forward_impl.1} parent=11 // pred_fallthru
        _
    $region12: #{_net_wrapper_forward_impl.1} parent=5 // pred_fallthru
      _
    %p283 = scmp.lt.s32.totalorder %s16, 2
    // Predicated region
    $region29: #{_net_wrapper_forward_impl.1} parent=5 // pred_check
      %p284 = pneg %p283
    $region30: #{_net_wrapper_forward_impl.1} parent=5 // pred_check_branch
      %286 = sbr.rel (%p284) target = $region32
    $region31: #{_net_wrapper_forward_impl.1} parent=5 // pred_region
      // Predicated region
      $region33: #{_net_wrapper_forward_impl.1} parent=31 // pred_check
        %p287 = pneg %p36
      $region34: #{_net_wrapper_forward_impl.1} parent=31 // pred_check_branch
        %289 = sbr.rel (%p287) target = $region36
      $region35: #{_net_wrapper_forward_impl.1} parent=31 // pred_region
        %p290 = scmp.lt.s32.totalorder %s16, 1
        %s291 = scalar_select %p290, %s16, 1
        %s292 = smul.addr %s291, 4
        %s293 = scalar_lea.vmem %s0, %s292
      $region36: #{_net_wrapper_forward_impl.1} parent=31 // pred_fallthru
        _
      // Predicated region
      $region37: #{_net_wrapper_forward_impl.1} parent=31 // pred_check
        %p294 = pneg %p62
      $region38: #{_net_wrapper_forward_impl.1} parent=31 // pred_check_branch
        %296 = sbr.rel (%p294) target = $region40
      $region39: #{_net_wrapper_forward_impl.1} parent=31 // pred_region
        %p297 = scmp.lt.s32.totalorder %s16, 1
        %s298 = scalar_select %p297, %s16, 1
        %s299 = smul.addr %s298, 4
        %s300 = smul.addr %s299, 4
        %s301 = scalar_lea.vmem %s1, %s300
      $region40: #{_net_wrapper_forward_impl.1} parent=31 // pred_fallthru
        _
    $region32: #{_net_wrapper_forward_impl.1} parent=5 // pred_fallthru
      _
    %p302 = scmp.le.s32.totalorder 1, %s16
    %p303 = scmp.lt.s32.totalorder %s16, 3
    %p304 = pnand %p302, %p303
    %p305 = pneg %p304
    // Predicated region
    $region41: #{_net_wrapper_forward_impl.1} parent=5 // pred_check
      _
    $region42: #{_net_wrapper_forward_impl.1} parent=5 // pred_check_branch
      %307 = sbr.rel (%p304) target = $region44
    $region43: #{_net_wrapper_forward_impl.1} parent=5 // pred_region
      %s308 = ssub.s32 %s16, 1
      %p309 = scmp.lt.s32.totalorder %s21, 1
      %s310 = scalar_select %p309, %s21, 1
      %s311 = smul.addr %s310, 4
      %s312 = scalar_lea.vmem %s0, %s311
      %p313 = pneg %p42
      %p314 = pneg %p39
      %p315 = scmp.lt.s32.totalorder %s21, 1
      %s316 = scalar_select %p315, %s21, 1
      %s317 = smul.addr %s316, 4
      %s318 = smul.addr %s317, 4
      %s319 = scalar_lea.vmem %s1, %s318
      %p320 = pneg %p68
      %p321 = pneg %p65
      %p322 = pneg %p89
      %p323 = pneg %p86
      %p324 = pneg %p110
      %p325 = pneg %p107
      %p326 = pneg %p131
      %p327 = pneg %p128
      %p328 = pneg %p152
      %p329 = pneg %p149
      %p330 = pneg %p178
      %p331 = pneg %p175
      %p332 = scmp.lt.s32.totalorder %s21, 1
      %s333 = scalar_select %p332, %s21, 1
      %s334 = smul.addr %s333, 4
      %s335 = scalar_lea.vmem %s6, %s334
      %p336 = pneg %p204
      %p337 = pneg %p201
      %p338 = scmp.lt.s32.totalorder %s21, 1
      %s339 = scalar_select %p338, %s21, 1
      %s340 = smul.addr %s339, 4
      %s341 = scalar_lea.vmem %s7, %s340
      %p342 = pneg %p230
      %p343 = pneg %p227
      %p344 = scmp.lt.s32.totalorder %s21, 1
      %s345 = scalar_select %p344, %s21, 1
      %s346 = smul.addr %s345, 4
      %s347 = scalar_lea.vmem %s8, %s346
      %p348 = pneg %p256
      %p349 = pneg %p253
      %p350 = scmp.lt.s32.totalorder %s21, 1
      %s351 = scalar_select %p350, %s21, 1
      %s352 = smul.addr %s351, 4
      %s353 = scalar_lea.vmem %s9, %s352
      %p354 = scmp.lt.s32.totalorder %s21, 1
      %s355 = scalar_select %p354, %s21, 1
      %s356 = smul.addr %s355, 4
      %s357 = scalar_lea.vmem %s0, %s356
      %p358 = scmp.lt.s32.totalorder %s21, 1
      %s359 = scalar_select %p358, %s21, 1
      %s360 = smul.addr %s359, 4
      %s361 = smul.addr %s360, 4
      %s362 = scalar_lea.vmem %s1, %s361
      %p363 = scmp.lt.s32.totalorder %s21, 1
      %s364 = scalar_select %p363, %s21, 1
      %s365 = smul.addr %s364, 4
      %s366 = scalar_lea.vmem %s6, %s365
      %p367 = scmp.lt.s32.totalorder %s21, 1
      %s368 = scalar_select %p367, %s21, 1
      %s369 = smul.addr %s368, 4
      %s370 = scalar_lea.vmem %s7, %s369
      %p371 = scmp.lt.s32.totalorder %s21, 1
      %s372 = scalar_select %p371, %s21, 1
      %s373 = smul.addr %s372, 4
      %s374 = scalar_lea.vmem %s8, %s373
      %p375 = scmp.lt.s32.totalorder %s21, 1
      %s376 = scalar_select %p375, %s21, 1
      %s377 = smul.addr %s376, 4
      %s378 = scalar_lea.vmem %s9, %s377
      %v379 = vld [vmem:[%s362] sm:$0x77]
      %v380 = vld [vmem:[%s362 + $0x8] sm:$0x77]
      %v383 = vcombine.high %v379, %v379
      %v384 = vcombine.high %v380, %v380
      %vm387 = vcmask 1042432
      %v388 = vsel %vm387, %v379, 0.0
      %v389 = vsel %vm387, %v383, 0.0
      %v390 = vadd.f32 %v388, %v389
      %v391 = vsel %vm387, %v380, 0.0
      %v392 = vadd.f32 %v390, %v391
      %v393 = vsel %vm387, %v384, 0.0
      %v394 = vadd.f32 %v392, %v393
      %395 = vadd.xlane.f32.xlu0 %v394
      %v396 = vpop.xlane.xlu0 %395
      %v397 = vrcp.pop 512.0
      %v398 = vmul.f32 %v396, %v397
      %v399 = vld [vmem:[%s2] sm:$0x7]
      %v400 = vmul.f32 %v398, %v399
      %vm401 = vcmask 256000
      %v402 = vsel %vm401, %v400, 0.0
      %v403 = vrot.slane %v402, 4
      %v404 = vadd.f32 %v402, %v403
      %v405 = vrot.slane %v404, 2
      %v406 = vadd.f32 %v404, %v405
      %v407 = vrot.slane %v406, 1
      %v408 = vadd.f32 %v406, %v407
      %v409 = vld [vmem:[%s3] sm:$0x1]
      %v410 = vadd.f32 %v408, %v409
      %v411 = vxor.u32 %v410, 2147483648
      %v412 = vmul.f32 %v411, 1.442695
      %v413 = vpow.pop %v412
      %v414 = vadd.f32 %v413, 1.0
      %v415 = vrcp.pop %v414
      %v416 = vmul.f32 1.0, %v415
      %v417 = vld [vmem:[%s4] sm:$0xff]
      %v418 = vlaneseq
      %v419 = vshrl.u32 %v418, 7
      %v420 = vsub.s32 0, %v419
      %v421 = vrot.slane %v416, %v420
      %v422 = vmul.f32 %v421, %v417
      %vm423 = vcmask 261120
      %v424 = vsel %vm423, %v422, 0.0
      %425 = vadd.xlane.f32.xlu0 %v424
      %v426 = vpop.xlane.xlu0 %425
      %v427 = vld [vmem:[%s5] sm:$0xff]
      %v428 = vadd.f32 %v426, %v427
      %s429 = vtos %v428
      %v430 = vrot.slane %v428, 1
      %s431 = vtos %v430
      %v432 = vrot.slane %v428, 2
      %s433 = vtos %v432
      %v434 = vrot.slane %v428, 3
      %s435 = vtos %v434
      %v436 = vrot.slane %v428, 4
      %s437 = vtos %v436
      %v438 = vld [vmem:[%s357] sm:$0xf]
      %v439 = vadd.f32 %v438, 1e-10
      %v440 = vlaneseq
      %vm441 = vcmp.ge.s32.totalorder %v440, 0
      %vm442 = vcmp.lt.s32.totalorder %v440, 512
      %vm443 = vmand %vm441, %vm442
      %444 = vst.msk [vmem:[%s366] sm:$0xf] %vm443, %v439
      %v445 = vlog2.pop %v439
      %v446 = vmul.f32 %v445, 0.6931472
      %v447 = vstv %s429
      %v448 = vmul.f32 %v446, %v447
      %v449 = vstv %s433
      %v450 = vadd.f32 %v448, %v449
      %v451 = vxor.u32 %v450, 2147483648
      %v452 = vmul.f32 %v451, 1.442695
      %v453 = vpow.pop %v452
      %v454 = vadd.f32 %v453, 1.0
      %v455 = vrcp.pop %v454
      %v456 = vmul.f32 1.0, %v455
      %457 = vst.msk [vmem:[%s370] sm:$0xf] %vm443, %v456
      %v458 = vstv %s431
      %v459 = vmul.f32 %v446, %v458
      %v460 = vstv %s435
      %v461 = vadd.f32 %v459, %v460
      %v462 = vxor.u32 %v461, 2147483648
      %v463 = vmul.f32 %v462, 1.442695
      %v464 = vpow.pop %v463
      %v465 = vadd.f32 %v464, 1.0
      %v466 = vrcp.pop %v465
      %v467 = vmul.f32 1.0, %v466
      %468 = vst.msk [vmem:[%s374] sm:$0xf] %vm443, %v467
      %v469 = vstv %s437
      %v470 = vmul.f32 %v446, %v469
      %v471 = vxor.u32 %v470, 2147483648
      %v472 = vmul.f32 %v471, 1.442695
      %v473 = vpow.pop %v472
      %v474 = vadd.f32 %v473, 1.0
      %v475 = vrcp.pop %v474
      %v476 = vmul.f32 1.0, %v475
      %477 = vst.msk [vmem:[%s378] sm:$0xf] %vm443, %v476
      %p478 = scmp.lt.s32.totalorder %s21, 1
      %s479 = scalar_select %p478, %s21, 1
      %s480 = smul.addr %s479, 4
      %s481 = scalar_lea.vmem %s6, %s480
      %p482 = scmp.lt.s32.totalorder %s21, 1
      %s483 = scalar_select %p482, %s21, 1
      %s484 = smul.addr %s483, 4
      %s485 = scalar_lea.vmem %s7, %s484
      %p486 = scmp.lt.s32.totalorder %s21, 1
      %s487 = scalar_select %p486, %s21, 1
      %s488 = smul.addr %s487, 4
      %s489 = scalar_lea.vmem %s8, %s488
      %p490 = scmp.lt.s32.totalorder %s21, 1
      %s491 = scalar_select %p490, %s21, 1
      %s492 = smul.addr %s491, 4
      %s493 = scalar_lea.vmem %s9, %s492
      // Predicated region
      $region45: #{_net_wrapper_forward_impl.1} parent=43 // pred_check
        %p494 = pneg %p175
      $region46: #{_net_wrapper_forward_impl.1} parent=43 // pred_check_branch
        %496 = sbr.rel (%p494) target = $region48
      $region47: #{_net_wrapper_forward_impl.1} parent=43 // pred_region
        _
      $region48: #{_net_wrapper_forward_impl.1} parent=43 // pred_fallthru
        _
      // Predicated region
      $region49: #{_net_wrapper_forward_impl.1} parent=43 // pred_check
        %p497 = pneg %p201
      $region50: #{_net_wrapper_forward_impl.1} parent=43 // pred_check_branch
        %499 = sbr.rel (%p497) target = $region52
      $region51: #{_net_wrapper_forward_impl.1} parent=43 // pred_region
        _
      $region52: #{_net_wrapper_forward_impl.1} parent=43 // pred_fallthru
        _
      // Predicated region
      $region53: #{_net_wrapper_forward_impl.1} parent=43 // pred_check
        %p500 = pneg %p227
      $region54: #{_net_wrapper_forward_impl.1} parent=43 // pred_check_branch
        %502 = sbr.rel (%p500) target = $region56
      $region55: #{_net_wrapper_forward_impl.1} parent=43 // pred_region
        _
      $region56: #{_net_wrapper_forward_impl.1} parent=43 // pred_fallthru
        _
      // Predicated region
      $region57: #{_net_wrapper_forward_impl.1} parent=43 // pred_check
        %p503 = pneg %p253
      $region58: #{_net_wrapper_forward_impl.1} parent=43 // pred_check_branch
        %505 = sbr.rel (%p503) target = $region60
      $region59: #{_net_wrapper_forward_impl.1} parent=43 // pred_region
        _
      $region60: #{_net_wrapper_forward_impl.1} parent=43 // pred_fallthru
        _
    $region44: #{_net_wrapper_forward_impl.1} parent=5 // pred_fallthru
      _
    %p506 = scmp.le.s32.totalorder 2, %s16
    // Predicated region
    $region61: #{_net_wrapper_forward_impl.1} parent=5 // pred_check
      %p507 = pneg %p506
    $region62: #{_net_wrapper_forward_impl.1} parent=5 // pred_check_branch
      %509 = sbr.rel (%p507) target = $region64
    $region63: #{_net_wrapper_forward_impl.1} parent=5 // pred_region
      %s510 = ssub.s32 %s16, 2
      // Predicated region
      $region65: #{_net_wrapper_forward_impl.1} parent=63 // pred_check
        %p511 = pneg %p181
      $region66: #{_net_wrapper_forward_impl.1} parent=63 // pred_check_branch
        %513 = sbr.rel (%p511) target = $region68
      $region67: #{_net_wrapper_forward_impl.1} parent=63 // pred_region
        %p514 = scmp.lt.s32.totalorder %s22, 1
        %s515 = scalar_select %p514, %s22, 1
        %s516 = smul.addr %s515, 4
        %s517 = scalar_lea.vmem %s6, %s516
      $region68: #{_net_wrapper_forward_impl.1} parent=63 // pred_fallthru
        _
      // Predicated region
      $region69: #{_net_wrapper_forward_impl.1} parent=63 // pred_check
        %p518 = pneg %p207
      $region70: #{_net_wrapper_forward_impl.1} parent=63 // pred_check_branch
        %520 = sbr.rel (%p518) target = $region72
      $region71: #{_net_wrapper_forward_impl.1} parent=63 // pred_region
        %p521 = scmp.lt.s32.totalorder %s22, 1
        %s522 = scalar_select %p521, %s22, 1
        %s523 = smul.addr %s522, 4
        %s524 = scalar_lea.vmem %s7, %s523
      $region72: #{_net_wrapper_forward_impl.1} parent=63 // pred_fallthru
        _
      // Predicated region
      $region73: #{_net_wrapper_forward_impl.1} parent=63 // pred_check
        %p525 = pneg %p233
      $region74: #{_net_wrapper_forward_impl.1} parent=63 // pred_check_branch
        %527 = sbr.rel (%p525) target = $region76
      $region75: #{_net_wrapper_forward_impl.1} parent=63 // pred_region
        %p528 = scmp.lt.s32.totalorder %s22, 1
        %s529 = scalar_select %p528, %s22, 1
        %s530 = smul.addr %s529, 4
        %s531 = scalar_lea.vmem %s8, %s530
      $region76: #{_net_wrapper_forward_impl.1} parent=63 // pred_fallthru
        _
      // Predicated region
      $region77: #{_net_wrapper_forward_impl.1} parent=63 // pred_check
        %p532 = pneg %p259
      $region78: #{_net_wrapper_forward_impl.1} parent=63 // pred_check_branch
        %534 = sbr.rel (%p532) target = $region80
      $region79: #{_net_wrapper_forward_impl.1} parent=63 // pred_region
        %p535 = scmp.lt.s32.totalorder %s22, 1
        %s536 = scalar_select %p535, %s22, 1
        %s537 = smul.addr %s536, 4
        %s538 = scalar_lea.vmem %s9, %s537
      $region80: #{_net_wrapper_forward_impl.1} parent=63 // pred_fallthru
        _
    $region64: #{_net_wrapper_forward_impl.1} parent=5 // pred_fallthru
      _
  $region6: #{_net_wrapper_forward_impl.1} parent=0 // loop_footer
    %s20 = sadd.s32 1, %s16
  $region7: #{_net_wrapper_forward_impl.1} parent=0 // loop_footer_branch
    %15 = sbr.rel target = $region3
  $region8: #{_net_wrapper_forward_impl.1} parent=0 // loop_exit
    _

</llo_original>
